<compile_context>
chip_gen: v7x
topology: tpu7x:2x2x1
jax: 0.10.0
libtpu: 0.0.40
codegen_flags: <defaults>
</compile_context>

<pallas_src>
import jax
import jax.numpy as jnp
from jax.experimental import pallas as pl
from jax.experimental.pallas import tpu as pltpu

_SUBLANE = 8
_LANE = 128
_BLOCK_BYTES = 4 * 1024 * 1024        # ~4 MiB input block
_VMEM_LIMIT_BYTES = 48 * 1024 * 1024  # explicit: safe on v7x (64 MiB physical)
_SMALL_HW_THRESHOLD = 512             # below this, merge C*HW onto the lane axis


def _frozen_bn_kernel(x_ref, scale_ref, shift_ref, o_ref):
    # x_ref: (r_tile, l_tile)
    # scale_ref/shift_ref: (r_tile, 1) [large-HW path] or (1, l_tile) [small-HW path]
    x = x_ref[...].astype(jnp.float32)
    o_ref[...] = (x * scale_ref[...] + shift_ref[...]).astype(o_ref.dtype)


def _pick_tiles_2d(R, L, itemsize):
    """Pick (r_tile, l_tile) for a (R, L) array obeying the (8,128) block rule
    (dtype-aware sublane quantum) and a ~_BLOCK_BYTES byte budget."""
    pack = max(1, 4 // itemsize)          # 1 f32, 2 bf16, 4 int8/fp8
    sub_q = _SUBLANE * pack               # 8 / 16 / 32 sublane quantum
    elem_budget = max(_BLOCK_BYTES // itemsize, sub_q * _LANE)

    # Lane (last) axis first: keep it dense.  Full L if it fits the budget
    # with at least min(R, sub_q) rows, otherwise a large multiple of 128.
    min_r = R if R < sub_q else sub_q
    if L * min_r <= elem_budget:
        l_tile = L                         # full dim -> no divisibility constraint
    else:
        l_tile = max(_LANE, ((elem_budget // min_r) // _LANE) * _LANE)

    # Sublane axis: full R if it fits, else a multiple of the packed quantum.
    max_r = max(1, elem_budget // l_tile)
    if R <= max_r:
        r_tile = R                         # full dim -> no divisibility constraint
    else:
        r_tile = max(sub_q, (max_r // sub_q) * sub_q)
    return r_tile, l_tile


def frozen_batch_norm_2d(x, weight, bias, running_mean, running_var, eps=1e-5):
    """x: NCHW array. Params: (C,) arrays. Returns NCHW array with x.dtype."""
    N, C, H, W = x.shape
    HW = H * W

    # Per-channel affine, computed once in f32.
    w = weight.astype(jnp.float32)
    b = bias.astype(jnp.float32)
    m = running_mean.astype(jnp.float32)
    v = running_var.astype(jnp.float32)
    scale = w * jax.lax.rsqrt(v + jnp.float32(eps))
    shift = b - m * scale

    itemsize = jnp.dtype(x.dtype).itemsize

    if HW >= _SMALL_HW_THRESHOLD:
        # Large spatial: (N*C, HW).  Sublanes = batch*channel, lanes = spatial.
        R, L = N * C, HW
        x2 = x.reshape(R, L)
        scale2 = jnp.tile(scale, N).reshape(R, 1)
        shift2 = jnp.tile(shift, N).reshape(R, 1)
        r_tile, l_tile = _pick_tiles_2d(R, L, itemsize)
        in_specs = [
            pl.BlockSpec((r_tile, l_tile), lambda ri, li: (ri, li)),
            pl.BlockSpec((r_tile, 1), lambda ri, li: (ri, 0)),
            pl.BlockSpec((r_tile, 1), lambda ri, li: (ri, 0)),
        ]
    else:
        # Small spatial: (N, C*HW).  Lane axis stays long and dense, per-element
        # scale/shift expanded along the lane axis, broadcast over sublanes (N).
        R, L = N, C * HW
        x2 = x.reshape(R, L)
        scale2 = jnp.repeat(scale, HW).reshape(1, L)
        shift2 = jnp.repeat(shift, HW).reshape(1, L)
        r_tile, l_tile = _pick_tiles_2d(R, L, itemsize)
        in_specs = [
            pl.BlockSpec((r_tile, l_tile), lambda ri, li: (ri, li)),
            pl.BlockSpec((1, l_tile), lambda ri, li: (0, li)),
            pl.BlockSpec((1, l_tile), lambda ri, li: (0, li)),
        ]

    grid = (pl.cdiv(R, r_tile), pl.cdiv(L, l_tile))
    out_spec = pl.BlockSpec((r_tile, l_tile), lambda ri, li: (ri, li))

    out2 = pl.pallas_call(
        _frozen_bn_kernel,
        out_shape=jax.ShapeDtypeStruct((R, L), x.dtype),
        grid_spec=pltpu.PrefetchScalarGridSpec(
            num_scalar_prefetch=0,
            grid=grid,
            in_specs=in_specs,
            out_specs=out_spec,
        ),
        compiler_params=pltpu.CompilerParams(
            dimension_semantics=("parallel", "parallel"),
            vmem_limit_bytes=_VMEM_LIMIT_BYTES),
    )(x2, scale2, shift2)

    return out2.reshape(N, C, H, W)


def _reference(x, weight, bias, running_mean, running_var, eps):
    C = x.shape[1]
    s = weight * jax.lax.rsqrt(running_var + eps)
    sh = bias - running_mean * s
    return x * s.reshape(1, C, 1, 1) + sh.reshape(1, C, 1, 1)


if __name__ == "__main__":
    key = jax.random.PRNGKey(0)
    eps = 1e-5

    ok = True
    # First shape exercises the small-HW (lane-merged) path; second exercises
    # the large-HW (N*C-on-sublanes) path.
    for (N, C, H, W) in [(2, 4, 16, 16), (2, 4, 32, 32)]:
        key, k_x, k_w, k_b, k_m, k_v = jax.random.split(key, 6)
        x = jax.random.normal(k_x, (N, C, H, W), dtype=jnp.float32)

        # Deterministic synthetic "frozen" buffers (same shapes as the module's
        # registered buffers; perturbed so the affine is nontrivial).
        weight = jnp.ones((C,), jnp.float32) + 0.1 * jax.random.normal(k_w, (C,), jnp.float32)
        bias = 0.1 * jax.random.normal(k_b, (C,), jnp.float32)
        running_mean = 0.1 * jax.random.normal(k_m, (C,), jnp.float32)
        running_var = (jnp.ones((C,), jnp.float32) - eps) + 0.05 * jnp.abs(
            jax.random.normal(k_v, (C,), jnp.float32))

        out = frozen_batch_norm_2d(x, weight, bias, running_mean, running_var, eps=eps)
        out = jax.block_until_ready(out)

        ref = _reference(x, weight, bias, running_mean, running_var, eps)
        ok &= (out.shape == x.shape and out.dtype == x.dtype)
        ok &= bool(jnp.allclose(out, ref, atol=1e-5, rtol=1e-5))

    assert ok, "mismatch vs reference"
    print("KERNEL_OK")
</pallas_src>

<mosaic_0001>
module attributes {stable_mosaic.version = 11 : i64} {
  func.func @_frozen_bn_kernel(%arg0: i32, %arg1: i32, %arg2: memref<2x1024xf32, #tpu.memory_space<vmem>>, %arg3: memref<1x1024xf32, #tpu.memory_space<vmem>>, %arg4: memref<1x1024xf32, #tpu.memory_space<vmem>>, %arg5: memref<2x1024xf32, #tpu.memory_space<vmem>>) attributes {dimension_semantics = [#tpu.dimension_semantics<parallel>, #tpu.dimension_semantics<parallel>], iteration_bounds = array<i64: 1, 1>, scalar_prefetch = 0 : i64, scratch_operands = 0 : i64, tpu.core_type = #tpu.core_type<tc>, window_params = [{transform_indices = @transform_0, window_bounds = array<i64: 2, 1024>}, {transform_indices = @transform_1, window_bounds = array<i64: 1, 1024>}, {transform_indices = @transform_2, window_bounds = array<i64: 1, 1024>}, {transform_indices = @transform_3, window_bounds = array<i64: 2, 1024>}]} {
    %c0 = arith.constant 0 : index
    %c0_0 = arith.constant 0 : index
    %0 = vector.load %arg2[%c0, %c0_0] : memref<2x1024xf32, #tpu.memory_space<vmem>>, vector<2x1024xf32>
    %c0_1 = arith.constant 0 : index
    %c0_2 = arith.constant 0 : index
    %1 = vector.load %arg3[%c0_1, %c0_2] : memref<1x1024xf32, #tpu.memory_space<vmem>>, vector<1x1024xf32>
    %2 = vector.broadcast %1 : vector<1x1024xf32> to vector<2x1024xf32>
    %3 = arith.mulf %0, %2 : vector<2x1024xf32>
    %c0_3 = arith.constant 0 : index
    %c0_4 = arith.constant 0 : index
    %4 = vector.load %arg4[%c0_3, %c0_4] : memref<1x1024xf32, #tpu.memory_space<vmem>>, vector<1x1024xf32>
    %5 = vector.broadcast %4 : vector<1x1024xf32> to vector<2x1024xf32>
    %6 = arith.addf %3, %5 : vector<2x1024xf32>
    %c0_5 = arith.constant 0 : index
    %c0_6 = arith.constant 0 : index
    %7 = vector.load %arg5[%c0_5, %c0_6] : memref<2x1024xf32, #tpu.memory_space<vmem>>, vector<2x1024xf32>
    tpu.vector_store %arg5[%c0_5, %c0_6], %6 {strides = array<i32>} : memref<2x1024xf32, #tpu.memory_space<vmem>>, vector<2x1024xf32>,
    return
  }
  func.func @transform_0(%arg0: i32, %arg1: i32) -> (i32, i32) {
    %c0_i32 = arith.constant 0 : i32
    return %arg0, %arg1 : i32, i32
  }
  func.func @transform_1(%arg0: i32, %arg1: i32) -> (i32, i32) {
    %c0_i32 = arith.constant 0 : i32
    %c0_i32_0 = arith.constant 0 : i32
    return %c0_i32, %arg1 : i32, i32
  }
  func.func @transform_2(%arg0: i32, %arg1: i32) -> (i32, i32) {
    %c0_i32 = arith.constant 0 : i32
    %c0_i32_0 = arith.constant 0 : i32
    return %c0_i32, %arg1 : i32, i32
  }
  func.func @transform_3(%arg0: i32, %arg1: i32) -> (i32, i32) {
    %c0_i32 = arith.constant 0 : i32
    return %arg0, %arg1 : i32, i32
  }
}

</mosaic_0001>

<llo_original>
// kernel: tpu_custom_call.1
$region0: #{tpu_custom_call.1}
  #allocation0 [shape = 'u32[]', space=smem, size = 0x4, offset = 0x4, fixed_abs, tag = 'smem constant byte address 0x4 - core index']
  #allocation1 [shape = 'u32[144,128]{1,0:T(1,128)}', space=vmem, size = 0x12000, scoped, tag = 'internal scratch']
  %s0 = inlined_call_operand.hbm [shape: f32[2,1024], index: 0, kind: input, shape index: {}]
  %s1 = inlined_call_operand.hbm [shape: f32[1,1024], index: 1, kind: input, shape index: {}]
  %s2 = inlined_call_operand.hbm [shape: f32[1,1024], index: 2, kind: input, shape index: {}]
  %s3 = inlined_call_operand.hbm [shape: f32[2,1024], index: 3, kind: output, shape index: {}]
  %s4 = sld [smem:[#allocation0]]
  $region34: #{tpu_custom_call.1} parent=0
    _
  %s6 = ssub.s32 1, %s4
  %s7 = scalar_select 0, %s6, %s4
  $region1: #{tpu_custom_call.1} parent=0
    #allocation2 [shape = 'u8[8192]{0}', space=vmem, size = 0x2000, scoped, tag = 'input window, operand 0, single buffered']
    #allocation3 [shape = 's32[1]{0}', space=sflag, size = 0x4, scoped, tag = 'scoped memory for tpu_custom_call.1']
    #allocation4 [shape = 's32[1]{0}', space=sflag, size = 0x4, scoped, tag = 'scoped memory for tpu_custom_call.1']
    #allocation5 [shape = 'u8[4096]{0}', space=vmem, size = 0x1000, scoped, tag = 'input window, operand 1, single buffered']
    #allocation6 [shape = 's32[1]{0}', space=sflag, size = 0x4, scoped, tag = 'scoped memory for tpu_custom_call.1']
    #allocation7 [shape = 'u8[4096]{0}', space=vmem, size = 0x1000, scoped, tag = 'input window, operand 2, single buffered']
    #allocation8 [shape = 'u8[8192]{0}', space=vmem, size = 0x2000, scoped, tag = 'output window, operand 0, single buffered']
    %8 = vsyncpa [#allocation3], 0
    %9 = vsyncpa [#allocation6], 0
    %10 = vsyncpa [#allocation4], 0
    // Predicated region
    $region2: #{tpu_custom_call.1} parent=1 // pred_check
      _
    $region3: #{tpu_custom_call.1} parent=1 // pred_check_branch
      %12 = sbr.rel (0) target = $region5
    $region4: #{tpu_custom_call.1} parent=1 // pred_region
      %s14 = ssub.s32 256, 256
      %15 = vsyncadd [#allocation3], %s14
      %s17 = sshll.u32 [#allocation2], 4
      %s18 = int_to_ptr.vmem [resolvable:$true] %s17
      %20 = dma.hbm_to_vmem [thread:$0]  %s0, 256, %s18, [#allocation3]
    $region5: #{tpu_custom_call.1} parent=1 // pred_fallthru
      _
    // Predicated region
    $region6: #{tpu_custom_call.1} parent=1 // pred_check
      _
    $region7: #{tpu_custom_call.1} parent=1 // pred_check_branch
      %22 = sbr.rel (0) target = $region9
    $region8: #{tpu_custom_call.1} parent=1 // pred_region
      %s24 = ssub.s32 128, 128
      %25 = vsyncadd [#allocation6], %s24
      %s27 = sshll.u32 [#allocation5], 4
      %s28 = int_to_ptr.vmem [resolvable:$true] %s27
      %30 = dma.hbm_to_vmem [thread:$0]  %s1, 128, %s28, [#allocation6]
    $region9: #{tpu_custom_call.1} parent=1 // pred_fallthru
      _
    // Predicated region
    $region10: #{tpu_custom_call.1} parent=1 // pred_check
      _
    $region11: #{tpu_custom_call.1} parent=1 // pred_check_branch
      %32 = sbr.rel (0) target = $region13
    $region12: #{tpu_custom_call.1} parent=1 // pred_region
      %s34 = ssub.s32 128, 128
      %35 = vsyncadd [#allocation6], %s34
      %s37 = sshll.u32 [#allocation7], 4
      %s38 = int_to_ptr.vmem [resolvable:$true] %s37
      %40 = dma.hbm_to_vmem [thread:$0]  %s2, 128, %s38, [#allocation6]
    $region13: #{tpu_custom_call.1} parent=1 // pred_fallthru
      _
    // Predicated region
    $region14: #{tpu_custom_call.1} parent=1 // pred_check
      _
    $region15: #{tpu_custom_call.1} parent=1 // pred_check_branch
      %42 = sbr.rel (0) target = $region17
    $region16: #{tpu_custom_call.1} parent=1 // pred_region
      %43 = dma.done [#allocation3], 256
    $region17: #{tpu_custom_call.1} parent=1 // pred_fallthru
      _
    // Predicated region
    $region18: #{tpu_custom_call.1} parent=1 // pred_check
      _
    $region19: #{tpu_custom_call.1} parent=1 // pred_check_branch
      %45 = sbr.rel (0) target = $region21
    $region20: #{tpu_custom_call.1} parent=1 // pred_region
      %46 = dma.done [#allocation6], 128
    $region21: #{tpu_custom_call.1} parent=1 // pred_fallthru
      _
    // Predicated region
    $region22: #{tpu_custom_call.1} parent=1 // pred_check
      _
    $region23: #{tpu_custom_call.1} parent=1 // pred_check_branch
      %48 = sbr.rel (0) target = $region25
    $region24: #{tpu_custom_call.1} parent=1 // pred_region
      %49 = dma.done [#allocation6], 128
    $region25: #{tpu_custom_call.1} parent=1 // pred_fallthru
      _
    %v50 = vld [vmem:[#allocation2] sm:$0xff]
    %v51 = vld [vmem:[#allocation2 + $0x8] sm:$0xff]
    %v52 = vld [vmem:[#allocation5] sm:$0xff]
    %v54 = vlaneseq
    %v55 = vshrl.u32 %v54, 7
    %v56 = vsub.s32 0, %v55
    %v57 = vrot.slane %v52, %v56
    %v58 = vlaneseq
    %v59 = vshrl.u32 %v58, 7
    %v60 = vsub.s32 1, %v59
    %v61 = vrot.slane %v52, %v60
    %v62 = vlaneseq
    %v63 = vshrl.u32 %v62, 7
    %v64 = vsub.s32 2, %v63
    %v65 = vrot.slane %v52, %v64
    %v66 = vlaneseq
    %v67 = vshrl.u32 %v66, 7
    %v68 = vsub.s32 3, %v67
    %v69 = vrot.slane %v52, %v68
    %v70 = vlaneseq
    %v71 = vshrl.u32 %v70, 7
    %v72 = vsub.s32 4, %v71
    %v73 = vrot.slane %v52, %v72
    %v74 = vlaneseq
    %v75 = vshrl.u32 %v74, 7
    %v76 = vsub.s32 5, %v75
    %v77 = vrot.slane %v52, %v76
    %v78 = vlaneseq
    %v79 = vshrl.u32 %v78, 7
    %v80 = vsub.s32 6, %v79
    %v81 = vrot.slane %v52, %v80
    %v82 = vlaneseq
    %v83 = vshrl.u32 %v82, 7
    %v84 = vsub.s32 7, %v83
    %v85 = vrot.slane %v52, %v84
    %v86 = vcombine.low %v57, %v61
    %v87 = vcombine.low %v65, %v69
    %v89 = vunpack.c.l.s4 1983009808
    %v90 = vunpack.c.0.s8 %v89
    %v91 = vlaneseq
    %v92 = vshrl.u32 %v91, 7
    %v93 = vsub.s32 %v90, %v92
    %v94 = vrot.slane %v86, %v93
    %v96 = vunpack.c.l.s4 1983009808
    %v97 = vunpack.c.0.s8 %v96
    %v98 = vlaneseq
    %v99 = vshrl.u32 %v98, 7
    %v100 = vsub.s32 %v97, %v99
    %v101 = vrot.slane %v87, %v100
    %v102 = vcombine.low %v94, %v101
    %v103 = vcombine.low %v73, %v77
    %v104 = vcombine.low %v81, %v85
    %v106 = vunpack.c.l.s4 1983009808
    %v107 = vunpack.c.0.s8 %v106
    %v108 = vlaneseq
    %v109 = vshrl.u32 %v108, 7
    %v110 = vsub.s32 %v107, %v109
    %v111 = vrot.slane %v103, %v110
    %v113 = vunpack.c.l.s4 1983009808
    %v114 = vunpack.c.0.s8 %v113
    %v115 = vlaneseq
    %v116 = vshrl.u32 %v115, 7
    %v117 = vsub.s32 %v114, %v116
    %v118 = vrot.slane %v104, %v117
    %v119 = vcombine.low %v111, %v118
    %v122 = vmul.f32 %v50, %v102
    %v123 = vmul.f32 %v51, %v119
    %v124 = vld [vmem:[#allocation7] sm:$0xff]
    %v126 = vlaneseq
    %v127 = vshrl.u32 %v126, 7
    %v128 = vsub.s32 0, %v127
    %v129 = vrot.slane %v124, %v128
    %v130 = vlaneseq
    %v131 = vshrl.u32 %v130, 7
    %v132 = vsub.s32 1, %v131
    %v133 = vrot.slane %v124, %v132
    %v134 = vlaneseq
    %v135 = vshrl.u32 %v134, 7
    %v136 = vsub.s32 2, %v135
    %v137 = vrot.slane %v124, %v136
    %v138 = vlaneseq
    %v139 = vshrl.u32 %v138, 7
    %v140 = vsub.s32 3, %v139
    %v141 = vrot.slane %v124, %v140
    %v142 = vlaneseq
    %v143 = vshrl.u32 %v142, 7
    %v144 = vsub.s32 4, %v143
    %v145 = vrot.slane %v124, %v144
    %v146 = vlaneseq
    %v147 = vshrl.u32 %v146, 7
    %v148 = vsub.s32 5, %v147
    %v149 = vrot.slane %v124, %v148
    %v150 = vlaneseq
    %v151 = vshrl.u32 %v150, 7
    %v152 = vsub.s32 6, %v151
    %v153 = vrot.slane %v124, %v152
    %v154 = vlaneseq
    %v155 = vshrl.u32 %v154, 7
    %v156 = vsub.s32 7, %v155
    %v157 = vrot.slane %v124, %v156
    %v158 = vcombine.low %v129, %v133
    %v159 = vcombine.low %v137, %v141
    %v161 = vunpack.c.l.s4 1983009808
    %v162 = vunpack.c.0.s8 %v161
    %v163 = vlaneseq
    %v164 = vshrl.u32 %v163, 7
    %v165 = vsub.s32 %v162, %v164
    %v166 = vrot.slane %v158, %v165
    %v168 = vunpack.c.l.s4 1983009808
    %v169 = vunpack.c.0.s8 %v168
    %v170 = vlaneseq
    %v171 = vshrl.u32 %v170, 7
    %v172 = vsub.s32 %v169, %v171
    %v173 = vrot.slane %v159, %v172
    %v174 = vcombine.low %v166, %v173
    %v175 = vcombine.low %v145, %v149
    %v176 = vcombine.low %v153, %v157
    %v178 = vunpack.c.l.s4 1983009808
    %v179 = vunpack.c.0.s8 %v178
    %v180 = vlaneseq
    %v181 = vshrl.u32 %v180, 7
    %v182 = vsub.s32 %v179, %v181
    %v183 = vrot.slane %v175, %v182
    %v185 = vunpack.c.l.s4 1983009808
    %v186 = vunpack.c.0.s8 %v185
    %v187 = vlaneseq
    %v188 = vshrl.u32 %v187, 7
    %v189 = vsub.s32 %v186, %v188
    %v190 = vrot.slane %v176, %v189
    %v191 = vcombine.low %v183, %v190
    %v194 = vadd.f32 %v122, %v174
    %v195 = vadd.f32 %v123, %v191
    %196 = vst [vmem:[#allocation8] sm:$0xff] %v194
    %197 = vst [vmem:[#allocation8 + $0x8] sm:$0xff] %v195
    // Predicated region
    $region26: #{tpu_custom_call.1} parent=1 // pred_check
      _
    $region27: #{tpu_custom_call.1} parent=1 // pred_check_branch
      %199 = sbr.rel (0) target = $region29
    $region28: #{tpu_custom_call.1} parent=1 // pred_region
      %s201 = ssub.s32 256, 256
      %202 = vsyncadd [#allocation4], %s201
      %s204 = sshll.u32 [#allocation8], 4
      %s205 = int_to_ptr.vmem [resolvable:$true] %s204
      %207 = dma.vmem_to_hbm [thread:$0]  %s205, 256, %s3, [#allocation4]
    $region29: #{tpu_custom_call.1} parent=1 // pred_fallthru
      _
    // Predicated region
    $region30: #{tpu_custom_call.1} parent=1 // pred_check
      _
    $region31: #{tpu_custom_call.1} parent=1 // pred_check_branch
      %209 = sbr.rel (0) target = $region33
    $region32: #{tpu_custom_call.1} parent=1 // pred_region
      %210 = dma.done [#allocation4], 256
    $region33: #{tpu_custom_call.1} parent=1 // pred_fallthru
      _
    %211 = vsyncpa [#allocation3], 1
    %212 = vsyncpa [#allocation6], 1
    %213 = vsyncpa [#allocation4], 1

</llo_original>
